<compile_context>
chip_gen: v6e
topology: v6e:2x2x1
jax: 0.10.0
libtpu: 0.0.40
codegen_flags: <defaults>
</compile_context>

<pallas_src>
import jax
import jax.numpy as jnp
from jax.experimental import pallas as pl
from jax.experimental.pallas import tpu as pltpu

# Model hyper-parameters (small, consistent with the module's __init__).
D_IN = 16          # d_in
D_HID = 32         # d_hid
N_LSTM_LAYERS = 1  # n_lstm_layers (single layer -> LSTM internal dropout = 0)
DS_HID = 64        # ds_hid = (64,)  (one hidden FC layer)
N_CLASSES = 4      # n_classes
N_INSTANCES = 8    # sequence length / bag size

_G4 = 4 * D_HID    # 128: gate width == packed lane width
assert _G4 == 128, "packing assumes 4*D_HID == 128 lanes"
assert DS_HID <= _G4 and N_CLASSES <= _G4 and D_HID <= _G4

# Row offsets inside the single packed (·, 128) parameter array.
_R_WIH = 0                      # (D_IN, 4H)   pre-transposed, gate-scaled
_R_WHH = _R_WIH + D_IN          # (D_HID, 4H)  pre-transposed, gate-scaled
_R_B = _R_WHH + D_HID           # (1, 4H)      b_ih + b_hh, gate-scaled
_R_H0 = _R_B + 1                # (1, 128)     h0 in lanes [0:D_HID]
_R_C0 = _R_H0 + 1               # (1, 128)     c0 in lanes [0:D_HID]
_R_W1 = _R_C0 + 1               # (D_HID, 128) fc1_w.T in lanes [0:DS_HID]
_R_B1 = _R_W1 + D_HID           # (1, 128)     fc1_b in lanes [0:DS_HID]
_R_W2 = _R_B1 + 1               # (128, 128)   fc2_w.T in rows [0:DS_HID], lanes [0:N_CLASSES]
_R_B2 = _R_W2 + _G4             # (1, 128)     fc2_b in lanes [0:N_CLASSES]
_R_TOT = _R_B2 + 1              # 213 rows total


def _lstm_instance_space_kernel(x_ref, p_ref, out_ref):
    """x_ref: (N, D_IN); p_ref: (_R_TOT, 128); out_ref: (N+1, 128)."""
    n = x_ref.shape[0]
    H = D_HID

    wih = p_ref[_R_WIH:_R_WIH + D_IN, :]        # (D_IN, 4H), i/f/o cols pre-scaled 0.5
    whh = p_ref[_R_WHH:_R_WHH + H, :]           # (D_HID, 4H), same scaling
    b = p_ref[_R_B:_R_B + 1, :]                 # (1, 4H), same scaling
    h = p_ref[_R_H0:_R_H0 + 1, :][:, 0:H]       # (1, D_HID)
    c = p_ref[_R_C0:_R_C0 + 1, :][:, 0:H]       # (1, D_HID)
    w1 = p_ref[_R_W1:_R_W1 + H, :]              # (D_HID, 128) lane-padded
    b1 = p_ref[_R_B1:_R_B1 + 1, :]              # (1, 128)
    w2 = p_ref[_R_W2:_R_W2 + _G4, :]            # (128, 128) zero-padded
    b2 = p_ref[_R_B2:_R_B2 + 1, :]              # (1, 128)

    # Hoisted input projection + bias for every timestep: one batched matmul.
    xw = jnp.dot(x_ref[...], wih, preferred_element_type=jnp.float32) + b   # (N, 4H)

    # Fully-unrolled recurrence; h/c stay in vregs.  PyTorch gate order i,f,g,o.
    hs = []
    for t in range(n):
        gates = xw[t:t + 1, :] + jnp.dot(h, whh, preferred_element_type=jnp.float32)
        t_all = jnp.tanh(gates)                 # one EUP call covers all 4 gates
        sig = t_all * 0.5 + 0.5                 # sigmoid(z) = 0.5*(tanh(z/2)+1); z/2 pre-folded
        i_g = sig[:, 0:H]
        f_g = sig[:, H:2 * H]
        g_g = t_all[:, 2 * H:3 * H]             # g gate columns were NOT pre-scaled
        o_g = sig[:, 3 * H:4 * H]
        c = f_g * c + i_g * g_g
        h = o_g * jnp.tanh(c)
        hs.append(h)

    hs_all = jnp.concatenate(hs, axis=0)        # (N, D_HID) cumulative hidden states

    # FullyConnectedStack: Linear -> ReLU -> (dropout=id) -> Linear, lane-padded frame.
    h1 = jnp.maximum(
        jnp.dot(hs_all, w1, preferred_element_type=jnp.float32) + b1, 0.0)     # (N, 128)
    preds = jnp.dot(h1, w2, preferred_element_type=jnp.float32) + b2           # (N, 128)

    # agg 'mean' over instances; single lane-dense store of preds + bag row.
    bag = jnp.mean(preds, axis=0, keepdims=True)                               # (1, 128)
    out_ref[...] = jnp.concatenate([preds, bag], axis=0)                       # (N+1, 128)


def _pack_params(params):
    """Pack all weights/biases/states into one lane-padded (R, 128) f32 array."""
    H = D_HID
    f32 = jnp.float32
    # 0.5 pre-scale on i/f/o gate columns enables the single-tanh trick.
    scale = jnp.concatenate([
        jnp.full((H,), 0.5, f32), jnp.full((H,), 0.5, f32),
        jnp.ones((H,), f32), jnp.full((H,), 0.5, f32),
    ])
    wih_t = params["w_ih"].T.astype(f32) * scale[None, :]                 # (D_IN, 4H)
    whh_t = params["w_hh"].T.astype(f32) * scale[None, :]                 # (D_HID, 4H)
    b = ((params["b_ih"] + params["b_hh"]).astype(f32) * scale).reshape(1, _G4)
    h0 = jnp.zeros((1, _G4), f32).at[:, :H].set(params["h0"].reshape(1, H).astype(f32))
    c0 = jnp.zeros((1, _G4), f32).at[:, :H].set(params["c0"].reshape(1, H).astype(f32))
    w1 = jnp.zeros((H, _G4), f32).at[:, :DS_HID].set(params["fc1_w"].T.astype(f32))
    b1 = jnp.zeros((1, _G4), f32).at[:, :DS_HID].set(params["fc1_b"].astype(f32))
    w2 = jnp.zeros((_G4, _G4), f32).at[:DS_HID, :N_CLASSES].set(params["fc2_w"].T.astype(f32))
    b2 = jnp.zeros((1, _G4), f32).at[:, :N_CLASSES].set(params["fc2_b"].astype(f32))
    packed = jnp.concatenate([wih_t, whh_t, b, h0, c0, w1, b1, w2, b2], axis=0)
    assert packed.shape == (_R_TOT, _G4)
    return packed


def init_params(key):
    """Deterministic synthetic parameters, shapes matching the PyTorch module."""
    ks = jax.random.split(key, 8)
    u = lambda k, shape, bound: jax.random.uniform(
        k, shape, jnp.float32, minval=-bound, maxval=bound
    )
    lstm_bound = 1.0 / jnp.sqrt(D_HID)
    params = {
        # nn.LSTM(d_in, d_hid, 1) parameters (PyTorch stores (4*H, in)).
        "w_ih": u(ks[0], (4 * D_HID, D_IN), lstm_bound),
        "w_hh": u(ks[1], (4 * D_HID, D_HID), lstm_bound),
        "b_ih": u(ks[2], (4 * D_HID,), lstm_bound),
        "b_hh": u(ks[3], (4 * D_HID,), lstm_bound),
        # init_hidden / init_cell nn.Parameters are initialized to zeros.
        "h0": jnp.zeros((N_LSTM_LAYERS, 1, D_HID), jnp.float32),
        "c0": jnp.zeros((N_LSTM_LAYERS, 1, D_HID), jnp.float32),
        # FullyConnectedStack(d_hid, (DS_HID,), n_classes)
        "fc1_w": u(ks[4], (DS_HID, D_HID), 1.0 / jnp.sqrt(D_HID)),
        "fc1_b": u(ks[5], (DS_HID,), 1.0 / jnp.sqrt(D_HID)),
        "fc2_w": u(ks[6], (N_CLASSES, DS_HID), 1.0 / jnp.sqrt(DS_HID)),
        "fc2_b": u(ks[7], (N_CLASSES,), 1.0 / jnp.sqrt(DS_HID)),
    }
    return params


@jax.jit
def lstm_instance_space_forward(instance_embeddings, params):
    n, d_in = instance_embeddings.shape
    assert d_in == D_IN

    packed = _pack_params(params)

    vmem = pl.BlockSpec(memory_space=pltpu.MemorySpace.VMEM)
    out = pl.pallas_call(
        _lstm_instance_space_kernel,
        out_shape=jax.ShapeDtypeStruct((n + 1, _G4), jnp.float32),
        in_specs=[vmem, vmem],
        out_specs=vmem,
    )(instance_embeddings.astype(jnp.float32), packed)

    # Match PyTorch output shapes:
    #   instance_predictions: (1, n_instances, n_classes)
    #   bag_prediction:       (n_classes,)  (mean over squeezed instance dim)
    instance_predictions = out[:n, :N_CLASSES].reshape(1, n, N_CLASSES)
    bag_prediction = out[n, :N_CLASSES]
    return bag_prediction, instance_predictions


if __name__ == "__main__":
    key = jax.random.PRNGKey(0)
    k_params, k_x = jax.random.split(key)
    params = init_params(k_params)
    x = jax.random.normal(k_x, (N_INSTANCES, D_IN), jnp.float32)

    bag_prediction, instance_predictions = lstm_instance_space_forward(x, params)
    jax.block_until_ready((bag_prediction, instance_predictions))

    assert bag_prediction.shape == (N_CLASSES,)
    assert instance_predictions.shape == (1, N_INSTANCES, N_CLASSES)
    print("KERNEL_OK")
</pallas_src>

<mosaic_0001>
module attributes {stable_mosaic.version = 11 : i64} {
  func.func @_lstm_instance_space_kernel(%arg0: memref<8x16xf32, #tpu.memory_space<vmem>>, %arg1: memref<213x128xf32, #tpu.memory_space<vmem>>, %arg2: memref<9x128xf32, #tpu.memory_space<vmem>>) attributes {dimension_semantics = [], scalar_prefetch = 0 : i64, scratch_operands = 0 : i64, tpu.core_type = #tpu.core_type<tc>} {
    %c0 = arith.constant 0 : index
    %c0_0 = arith.constant 0 : index
    %0 = vector.load %arg1[%c0, %c0_0] : memref<213x128xf32, #tpu.memory_space<vmem>>, vector<16x128xf32>
    %c16 = arith.constant 16 : index
    %c0_1 = arith.constant 0 : index
    %1 = vector.load %arg1[%c16, %c0_1] : memref<213x128xf32, #tpu.memory_space<vmem>>, vector<32x128xf32>
    %c48 = arith.constant 48 : index
    %c0_2 = arith.constant 0 : index
    %2 = vector.load %arg1[%c48, %c0_2] : memref<213x128xf32, #tpu.memory_space<vmem>>, vector<1x128xf32>
    %c49 = arith.constant 49 : index
    %c0_3 = arith.constant 0 : index
    %3 = vector.load %arg1[%c49, %c0_3] : memref<213x128xf32, #tpu.memory_space<vmem>>, vector<1x128xf32>
    %4 = vector.extract_strided_slice %3 {offsets = [0, 0], sizes = [1, 32], strides = [1, 1]} : vector<1x128xf32> to vector<1x32xf32>
    %c50 = arith.constant 50 : index
    %c0_4 = arith.constant 0 : index
    %5 = vector.load %arg1[%c50, %c0_4] : memref<213x128xf32, #tpu.memory_space<vmem>>, vector<1x128xf32>
    %6 = vector.extract_strided_slice %5 {offsets = [0, 0], sizes = [1, 32], strides = [1, 1]} : vector<1x128xf32> to vector<1x32xf32>
    %c51 = arith.constant 51 : index
    %c0_5 = arith.constant 0 : index
    %7 = vector.load %arg1[%c51, %c0_5] : memref<213x128xf32, #tpu.memory_space<vmem>>, vector<32x128xf32>
    %c83 = arith.constant 83 : index
    %c0_6 = arith.constant 0 : index
    %8 = vector.load %arg1[%c83, %c0_6] : memref<213x128xf32, #tpu.memory_space<vmem>>, vector<1x128xf32>
    %c84 = arith.constant 84 : index
    %c0_7 = arith.constant 0 : index
    %9 = vector.load %arg1[%c84, %c0_7] : memref<213x128xf32, #tpu.memory_space<vmem>>, vector<128x128xf32>
    %c212 = arith.constant 212 : index
    %c0_8 = arith.constant 0 : index
    %10 = vector.load %arg1[%c212, %c0_8] : memref<213x128xf32, #tpu.memory_space<vmem>>, vector<1x128xf32>
    %c0_9 = arith.constant 0 : index
    %c0_10 = arith.constant 0 : index
    %11 = vector.load %arg0[%c0_9, %c0_10] : memref<8x16xf32, #tpu.memory_space<vmem>>, vector<8x16xf32>
    %cst = arith.constant dense<0.000000e+00> : vector<8x128xf32>
    %12 = tpu.matmul %11, %0, %cst {dimension_numbers = #tpu.dot_dimension_numbers<[1], [0], [0], [1], [0, 0, 1, 1], [], []>} : vector<8x16xf32>, vector<16x128xf32>, vector<8x128xf32> -> vector<8x128xf32>
    %13 = vector.broadcast %2 : vector<1x128xf32> to vector<8x128xf32>
    %14 = arith.addf %12, %13 : vector<8x128xf32>
    %15 = vector.extract_strided_slice %14 {offsets = [0, 0], sizes = [1, 128], strides = [1, 1]} : vector<8x128xf32> to vector<1x128xf32>
    %cst_11 = arith.constant dense<0.000000e+00> : vector<1x128xf32>
    %16 = tpu.matmul %4, %1, %cst_11 {dimension_numbers = #tpu.dot_dimension_numbers<[1], [0], [0], [1], [0, 0, 1, 1], [], []>} : vector<1x32xf32>, vector<32x128xf32>, vector<1x128xf32> -> vector<1x128xf32>
    %17 = arith.addf %15, %16 : vector<1x128xf32>
    %18 = math.tanh %17 : vector<1x128xf32>
    %cst_12 = arith.constant 5.000000e-01 : f32
    %19 = vector.broadcast %cst_12 : f32 to vector<1x128xf32>
    %20 = arith.mulf %18, %19 : vector<1x128xf32>
    %cst_13 = arith.constant 5.000000e-01 : f32
    %21 = vector.broadcast %cst_13 : f32 to vector<1x128xf32>
    %22 = arith.addf %20, %21 : vector<1x128xf32>
    %23 = vector.extract_strided_slice %22 {offsets = [0, 0], sizes = [1, 32], strides = [1, 1]} : vector<1x128xf32> to vector<1x32xf32>
    %24 = vector.extract_strided_slice %22 {offsets = [0, 32], sizes = [1, 32], strides = [1, 1]} : vector<1x128xf32> to vector<1x32xf32>
    %25 = vector.extract_strided_slice %18 {offsets = [0, 64], sizes = [1, 32], strides = [1, 1]} : vector<1x128xf32> to vector<1x32xf32>
    %26 = vector.extract_strided_slice %22 {offsets = [0, 96], sizes = [1, 32], strides = [1, 1]} : vector<1x128xf32> to vector<1x32xf32>
    %27 = arith.mulf %24, %6 : vector<1x32xf32>
    %28 = arith.mulf %23, %25 : vector<1x32xf32>
    %29 = arith.addf %27, %28 : vector<1x32xf32>
    %30 = math.tanh %29 : vector<1x32xf32>
    %31 = arith.mulf %26, %30 : vector<1x32xf32>
    %32 = vector.extract_strided_slice %14 {offsets = [1, 0], sizes = [1, 128], strides = [1, 1]} : vector<8x128xf32> to vector<1x128xf32>
    %cst_14 = arith.constant dense<0.000000e+00> : vector<1x128xf32>
    %33 = tpu.matmul %31, %1, %cst_14 {dimension_numbers = #tpu.dot_dimension_numbers<[1], [0], [0], [1], [0, 0, 1, 1], [], []>} : vector<1x32xf32>, vector<32x128xf32>, vector<1x128xf32> -> vector<1x128xf32>
    %34 = arith.addf %32, %33 : vector<1x128xf32>
    %35 = math.tanh %34 : vector<1x128xf32>
    %cst_15 = arith.constant 5.000000e-01 : f32
    %36 = vector.broadcast %cst_15 : f32 to vector<1x128xf32>
    %37 = arith.mulf %35, %36 : vector<1x128xf32>
    %cst_16 = arith.constant 5.000000e-01 : f32
    %38 = vector.broadcast %cst_16 : f32 to vector<1x128xf32>
    %39 = arith.addf %37, %38 : vector<1x128xf32>
    %40 = vector.extract_strided_slice %39 {offsets = [0, 0], sizes = [1, 32], strides = [1, 1]} : vector<1x128xf32> to vector<1x32xf32>
    %41 = vector.extract_strided_slice %39 {offsets = [0, 32], sizes = [1, 32], strides = [1, 1]} : vector<1x128xf32> to vector<1x32xf32>
    %42 = vector.extract_strided_slice %35 {offsets = [0, 64], sizes = [1, 32], strides = [1, 1]} : vector<1x128xf32> to vector<1x32xf32>
    %43 = vector.extract_strided_slice %39 {offsets = [0, 96], sizes = [1, 32], strides = [1, 1]} : vector<1x128xf32> to vector<1x32xf32>
    %44 = arith.mulf %41, %29 : vector<1x32xf32>
    %45 = arith.mulf %40, %42 : vector<1x32xf32>
    %46 = arith.addf %44, %45 : vector<1x32xf32>
    %47 = math.tanh %46 : vector<1x32xf32>
    %48 = arith.mulf %43, %47 : vector<1x32xf32>
    %49 = vector.extract_strided_slice %14 {offsets = [2, 0], sizes = [1, 128], strides = [1, 1]} : vector<8x128xf32> to vector<1x128xf32>
    %cst_17 = arith.constant dense<0.000000e+00> : vector<1x128xf32>
    %50 = tpu.matmul %48, %1, %cst_17 {dimension_numbers = #tpu.dot_dimension_numbers<[1], [0], [0], [1], [0, 0, 1, 1], [], []>} : vector<1x32xf32>, vector<32x128xf32>, vector<1x128xf32> -> vector<1x128xf32>
    %51 = arith.addf %49, %50 : vector<1x128xf32>
    %52 = math.tanh %51 : vector<1x128xf32>
    %cst_18 = arith.constant 5.000000e-01 : f32
    %53 = vector.broadcast %cst_18 : f32 to vector<1x128xf32>
    %54 = arith.mulf %52, %53 : vector<1x128xf32>
    %cst_19 = arith.constant 5.000000e-01 : f32
    %55 = vector.broadcast %cst_19 : f32 to vector<1x128xf32>
    %56 = arith.addf %54, %55 : vector<1x128xf32>
    %57 = vector.extract_strided_slice %56 {offsets = [0, 0], sizes = [1, 32], strides = [1, 1]} : vector<1x128xf32> to vector<1x32xf32>
    %58 = vector.extract_strided_slice %56 {offsets = [0, 32], sizes = [1, 32], strides = [1, 1]} : vector<1x128xf32> to vector<1x32xf32>
    %59 = vector.extract_strided_slice %52 {offsets = [0, 64], sizes = [1, 32], strides = [1, 1]} : vector<1x128xf32> to vector<1x32xf32>
    %60 = vector.extract_strided_slice %56 {offsets = [0, 96], sizes = [1, 32], strides = [1, 1]} : vector<1x128xf32> to vector<1x32xf32>
    %61 = arith.mulf %58, %46 : vector<1x32xf32>
    %62 = arith.mulf %57, %59 : vector<1x32xf32>
    %63 = arith.addf %61, %62 : vector<1x32xf32>
    %64 = math.tanh %63 : vector<1x32xf32>
    %65 = arith.mulf %60, %64 : vector<1x32xf32>
    %66 = vector.extract_strided_slice %14 {offsets = [3, 0], sizes = [1, 128], strides = [1, 1]} : vector<8x128xf32> to vector<1x128xf32>
    %cst_20 = arith.constant dense<0.000000e+00> : vector<1x128xf32>
    %67 = tpu.matmul %65, %1, %cst_20 {dimension_numbers = #tpu.dot_dimension_numbers<[1], [0], [0], [1], [0, 0, 1, 1], [], []>} : vector<1x32xf32>, vector<32x128xf32>, vector<1x128xf32> -> vector<1x128xf32>
    %68 = arith.addf %66, %67 : vector<1x128xf32>
    %69 = math.tanh %68 : vector<1x128xf32>
    %cst_21 = arith.constant 5.000000e-01 : f32
    %70 = vector.broadcast %cst_21 : f32 to vector<1x128xf32>
    %71 = arith.mulf %69, %70 : vector<1x128xf32>
    %cst_22 = arith.constant 5.000000e-01 : f32
    %72 = vector.broadcast %cst_22 : f32 to vector<1x128xf32>
    %73 = arith.addf %71, %72 : vector<1x128xf32>
    %74 = vector.extract_strided_slice %73 {offsets = [0, 0], sizes = [1, 32], strides = [1, 1]} : vector<1x128xf32> to vector<1x32xf32>
    %75 = vector.extract_strided_slice %73 {offsets = [0, 32], sizes = [1, 32], strides = [1, 1]} : vector<1x128xf32> to vector<1x32xf32>
    %76 = vector.extract_strided_slice %69 {offsets = [0, 64], sizes = [1, 32], strides = [1, 1]} : vector<1x128xf32> to vector<1x32xf32>
    %77 = vector.extract_strided_slice %73 {offsets = [0, 96], sizes = [1, 32], strides = [1, 1]} : vector<1x128xf32> to vector<1x32xf32>
    %78 = arith.mulf %75, %63 : vector<1x32xf32>
    %79 = arith.mulf %74, %76 : vector<1x32xf32>
    %80 = arith.addf %78, %79 : vector<1x32xf32>
    %81 = math.tanh %80 : vector<1x32xf32>
    %82 = arith.mulf %77, %81 : vector<1x32xf32>
    %83 = vector.extract_strided_slice %14 {offsets = [4, 0], sizes = [1, 128], strides = [1, 1]} : vector<8x128xf32> to vector<1x128xf32>
    %cst_23 = arith.constant dense<0.000000e+00> : vector<1x128xf32>
    %84 = tpu.matmul %82, %1, %cst_23 {dimension_numbers = #tpu.dot_dimension_numbers<[1], [0], [0], [1], [0, 0, 1, 1], [], []>} : vector<1x32xf32>, vector<32x128xf32>, vector<1x128xf32> -> vector<1x128xf32>
    %85 = arith.addf %83, %84 : vector<1x128xf32>
    %86 = math.tanh %85 : vector<1x128xf32>
    %cst_24 = arith.constant 5.000000e-01 : f32
    %87 = vector.broadcast %cst_24 : f32 to vector<1x128xf32>
    %88 = arith.mulf %86, %87 : vector<1x128xf32>
    %cst_25 = arith.constant 5.000000e-01 : f32
    %89 = vector.broadcast %cst_25 : f32 to vector<1x128xf32>
    %90 = arith.addf %88, %89 : vector<1x128xf32>
    %91 = vector.extract_strided_slice %90 {offsets = [0, 0], sizes = [1, 32], strides = [1, 1]} : vector<1x128xf32> to vector<1x32xf32>
    %92 = vector.extract_strided_slice %90 {offsets = [0, 32], sizes = [1, 32], strides = [1, 1]} : vector<1x128xf32> to vector<1x32xf32>
    %93 = vector.extract_strided_slice %86 {offsets = [0, 64], sizes = [1, 32], strides = [1, 1]} : vector<1x128xf32> to vector<1x32xf32>
    %94 = vector.extract_strided_slice %90 {offsets = [0, 96], sizes = [1, 32], strides = [1, 1]} : vector<1x128xf32> to vector<1x32xf32>
    %95 = arith.mulf %92, %80 : vector<1x32xf32>
    %96 = arith.mulf %91, %93 : vector<1x32xf32>
    %97 = arith.addf %95, %96 : vector<1x32xf32>
    %98 = math.tanh %97 : vector<1x32xf32>
    %99 = arith.mulf %94, %98 : vector<1x32xf32>
    %100 = vector.extract_strided_slice %14 {offsets = [5, 0], sizes = [1, 128], strides = [1, 1]} : vector<8x128xf32> to vector<1x128xf32>
    %cst_26 = arith.constant dense<0.000000e+00> : vector<1x128xf32>
    %101 = tpu.matmul %99, %1, %cst_26 {dimension_numbers = #tpu.dot_dimension_numbers<[1], [0], [0], [1], [0, 0, 1, 1], [], []>} : vector<1x32xf32>, vector<32x128xf32>, vector<1x128xf32> -> vector<1x128xf32>
    %102 = arith.addf %100, %101 : vector<1x128xf32>
    %103 = math.tanh %102 : vector<1x128xf32>
    %cst_27 = arith.constant 5.000000e-01 : f32
    %104 = vector.broadcast %cst_27 : f32 to vector<1x128xf32>
    %105 = arith.mulf %103, %104 : vector<1x128xf32>
    %cst_28 = arith.constant 5.000000e-01 : f32
    %106 = vector.broadcast %cst_28 : f32 to vector<1x128xf32>
    %107 = arith.addf %105, %106 : vector<1x128xf32>
    %108 = vector.extract_strided_slice %107 {offsets = [0, 0], sizes = [1, 32], strides = [1, 1]} : vector<1x128xf32> to vector<1x32xf32>
    %109 = vector.extract_strided_slice %107 {offsets = [0, 32], sizes = [1, 32], strides = [1, 1]} : vector<1x128xf32> to vector<1x32xf32>
    %110 = vector.extract_strided_slice %103 {offsets = [0, 64], sizes = [1, 32], strides = [1, 1]} : vector<1x128xf32> to vector<1x32xf32>
    %111 = vector.extract_strided_slice %107 {offsets = [0, 96], sizes = [1, 32], strides = [1, 1]} : vector<1x128xf32> to vector<1x32xf32>
    %112 = arith.mulf %109, %97 : vector<1x32xf32>
    %113 = arith.mulf %108, %110 : vector<1x32xf32>
    %114 = arith.addf %112, %113 : vector<1x32xf32>
    %115 = math.tanh %114 : vector<1x32xf32>
    %116 = arith.mulf %111, %115 : vector<1x32xf32>
    %117 = vector.extract_strided_slice %14 {offsets = [6, 0], sizes = [1, 128], strides = [1, 1]} : vector<8x128xf32> to vector<1x128xf32>
    %cst_29 = arith.constant dense<0.000000e+00> : vector<1x128xf32>
    %118 = tpu.matmul %116, %1, %cst_29 {dimension_numbers = #tpu.dot_dimension_numbers<[1], [0], [0], [1], [0, 0, 1, 1], [], []>} : vector<1x32xf32>, vector<32x128xf32>, vector<1x128xf32> -> vector<1x128xf32>
    %119 = arith.addf %117, %118 : vector<1x128xf32>
    %120 = math.tanh %119 : vector<1x128xf32>
    %cst_30 = arith.constant 5.000000e-01 : f32
    %121 = vector.broadcast %cst_30 : f32 to vector<1x128xf32>
    %122 = arith.mulf %120, %121 : vector<1x128xf32>
    %cst_31 = arith.constant 5.000000e-01 : f32
    %123 = vector.broadcast %cst_31 : f32 to vector<1x128xf32>
    %124 = arith.addf %122, %123 : vector<1x128xf32>
    %125 = vector.extract_strided_slice %124 {offsets = [0, 0], sizes = [1, 32], strides = [1, 1]} : vector<1x128xf32> to vector<1x32xf32>
    %126 = vector.extract_strided_slice %124 {offsets = [0, 32], sizes = [1, 32], strides = [1, 1]} : vector<1x128xf32> to vector<1x32xf32>
    %127 = vector.extract_strided_slice %120 {offsets = [0, 64], sizes = [1, 32], strides = [1, 1]} : vector<1x128xf32> to vector<1x32xf32>
    %128 = vector.extract_strided_slice %124 {offsets = [0, 96], sizes = [1, 32], strides = [1, 1]} : vector<1x128xf32> to vector<1x32xf32>
    %129 = arith.mulf %126, %114 : vector<1x32xf32>
    %130 = arith.mulf %125, %127 : vector<1x32xf32>
    %131 = arith.addf %129, %130 : vector<1x32xf32>
    %132 = math.tanh %131 : vector<1x32xf32>
    %133 = arith.mulf %128, %132 : vector<1x32xf32>
    %134 = vector.extract_strided_slice %14 {offsets = [7, 0], sizes = [1, 128], strides = [1, 1]} : vector<8x128xf32> to vector<1x128xf32>
    %cst_32 = arith.constant dense<0.000000e+00> : vector<1x128xf32>
    %135 = tpu.matmul %133, %1, %cst_32 {dimension_numbers = #tpu.dot_dimension_numbers<[1], [0], [0], [1], [0, 0, 1, 1], [], []>} : vector<1x32xf32>, vector<32x128xf32>, vector<1x128xf32> -> vector<1x128xf32>
    %136 = arith.addf %134, %135 : vector<1x128xf32>
    %137 = math.tanh %136 : vector<1x128xf32>
    %cst_33 = arith.constant 5.000000e-01 : f32
    %138 = vector.broadcast %cst_33 : f32 to vector<1x128xf32>
    %139 = arith.mulf %137, %138 : vector<1x128xf32>
    %cst_34 = arith.constant 5.000000e-01 : f32
    %140 = vector.broadcast %cst_34 : f32 to vector<1x128xf32>
    %141 = arith.addf %139, %140 : vector<1x128xf32>
    %142 = vector.extract_strided_slice %141 {offsets = [0, 0], sizes = [1, 32], strides = [1, 1]} : vector<1x128xf32> to vector<1x32xf32>
    %143 = vector.extract_strided_slice %141 {offsets = [0, 32], sizes = [1, 32], strides = [1, 1]} : vector<1x128xf32> to vector<1x32xf32>
    %144 = vector.extract_strided_slice %137 {offsets = [0, 64], sizes = [1, 32], strides = [1, 1]} : vector<1x128xf32> to vector<1x32xf32>
    %145 = vector.extract_strided_slice %141 {offsets = [0, 96], sizes = [1, 32], strides = [1, 1]} : vector<1x128xf32> to vector<1x32xf32>
    %146 = arith.mulf %143, %131 : vector<1x32xf32>
    %147 = arith.mulf %142, %144 : vector<1x32xf32>
    %148 = arith.addf %146, %147 : vector<1x32xf32>
    %149 = math.tanh %148 : vector<1x32xf32>
    %150 = arith.mulf %145, %149 : vector<1x32xf32>
    %151 = tpu.concatenate %31, %48, %65, %82, %99, %116, %133, %150 in 0 : vector<1x32xf32>, vector<1x32xf32>, vector<1x32xf32>, vector<1x32xf32>, vector<1x32xf32>, vector<1x32xf32>, vector<1x32xf32>, vector<1x32xf32> -> vector<8x32xf32>
    %cst_35 = arith.constant dense<0.000000e+00> : vector<8x128xf32>
    %152 = tpu.matmul %151, %7, %cst_35 {dimension_numbers = #tpu.dot_dimension_numbers<[1], [0], [0], [1], [0, 0, 1, 1], [], []>} : vector<8x32xf32>, vector<32x128xf32>, vector<8x128xf32> -> vector<8x128xf32>
    %153 = vector.broadcast %8 : vector<1x128xf32> to vector<8x128xf32>
    %154 = arith.addf %152, %153 : vector<8x128xf32>
    %cst_36 = arith.constant 0.000000e+00 : f32
    %155 = vector.broadcast %cst_36 : f32 to vector<8x128xf32>
    %156 = arith.maximumf %154, %155 : vector<8x128xf32>
    %cst_37 = arith.constant dense<0.000000e+00> : vector<8x128xf32>
    %157 = tpu.matmul %156, %9, %cst_37 {dimension_numbers = #tpu.dot_dimension_numbers<[1], [0], [0], [1], [0, 0, 1, 1], [], []>} : vector<8x128xf32>, vector<128x128xf32>, vector<8x128xf32> -> vector<8x128xf32>
    %158 = vector.broadcast %10 : vector<1x128xf32> to vector<8x128xf32>
    %159 = arith.addf %157, %158 : vector<8x128xf32>
    %cst_38 = arith.constant dense<0.000000e+00> : vector<128xf32>
    %160 = vector.multi_reduction <add>, %159, %cst_38 [0] : vector<8x128xf32> to vector<128xf32>
    %161 = vector.shape_cast %160 : vector<128xf32> to vector<1x128xf32>
    %cst_39 = arith.constant 8.000000e+00 : f32
    %162 = vector.broadcast %cst_39 : f32 to vector<1x128xf32>
    %163 = arith.divf %161, %162 : vector<1x128xf32>
    %164 = tpu.concatenate %159, %163 in 0 : vector<8x128xf32>, vector<1x128xf32> -> vector<9x128xf32>
    %c0_40 = arith.constant 0 : index
    %c0_41 = arith.constant 0 : index
    %165 = vector.load %arg2[%c0_40, %c0_41] : memref<9x128xf32, #tpu.memory_space<vmem>>, vector<9x128xf32>
    tpu.vector_store %arg2[%c0_40, %c0_41], %164 {strides = array<i32>} : memref<9x128xf32, #tpu.memory_space<vmem>>, vector<9x128xf32>,
    return
  }
}

</mosaic_0001>

<llo_original>
// kernel: lstm_instance_space_forward.1
$region0: #{lstm_instance_space_forward.1}
  #allocation0 [shape = 'u32[]', space=smem, size = 0x4, offset = 0x4, fixed_abs, tag = 'smem constant byte address 0x4 - core index']
  #allocation1 [shape = 'u32[144,128]{1,0:T(1,128)}', space=vmem, size = 0x12000, scoped, tag = 'internal scratch']
  %s0 = inlined_call_operand.vmem [shape: f32[8,16], index: 0, kind: input, shape index: {}]
  %s1 = inlined_call_operand.vmem [shape: f32[213,128], index: 1, kind: input, shape index: {}]
  %s2 = inlined_call_operand.vmem [shape: f32[9,128], index: 2, kind: output, shape index: {}]
  %s3 = sld [smem:[#allocation0]]
  $region18: #{lstm_instance_space_forward.1} parent=0
    _
  %s5 = ssub.s32 1, %s3
  %s6 = scalar_select 0, %s5, %s3
  // Predicated region
  $region2: #{lstm_instance_space_forward.1} parent=0 // pred_check
    _
  $region3: #{lstm_instance_space_forward.1} parent=0 // pred_check_branch
    %8 = sbr.rel (0) target = $region5
  $region4: #{lstm_instance_space_forward.1} parent=0 // pred_region
    _
  $region5: #{lstm_instance_space_forward.1} parent=0 // pred_fallthru
    _
  // Predicated region
  $region6: #{lstm_instance_space_forward.1} parent=0 // pred_check
    _
  $region7: #{lstm_instance_space_forward.1} parent=0 // pred_check_branch
    %10 = sbr.rel (0) target = $region9
  $region8: #{lstm_instance_space_forward.1} parent=0 // pred_region
    _
  $region9: #{lstm_instance_space_forward.1} parent=0 // pred_fallthru
    _
  %v11 = vld [vmem:[%s1] sm:$0xff]
  %v12 = vld [vmem:[%s1 + $0x8] sm:$0xff]
  %v13 = vld [vmem:[%s1 + $0x10] sm:$0xff]
  %v14 = vld [vmem:[%s1 + $0x18] sm:$0xff]
  %v15 = vld [vmem:[%s1 + $0x20] sm:$0xff]
  %v16 = vld [vmem:[%s1 + $0x28] sm:$0xff]
  %v17 = vld [vmem:[%s1 + $0x30] sm:$0x1]
  %v18 = vld [vmem:[%s1 + $0x31] sm:$0x1]
  %v19 = vld [vmem:[%s1 + $0x32] sm:$0x1]
  %v20 = vld [vmem:[%s1 + $0x33] sm:$0xff]
  %v21 = vld [vmem:[%s1 + $0x3b] sm:$0xff]
  %v22 = vld [vmem:[%s1 + $0x43] sm:$0xff]
  %v23 = vld [vmem:[%s1 + $0x4b] sm:$0xff]
  %v24 = vld [vmem:[%s1 + $0x53] sm:$0x1]
  %v25 = vld [vmem:[%s1 + $0x54] sm:$0xff]
  %v26 = vld [vmem:[%s1 + $0x5c] sm:$0xff]
  %v27 = vld [vmem:[%s1 + $0x64] sm:$0xff]
  %v28 = vld [vmem:[%s1 + $0x6c] sm:$0xff]
  %v29 = vld [vmem:[%s1 + $0x74] sm:$0xff]
  %v30 = vld [vmem:[%s1 + $0x7c] sm:$0xff]
  %v31 = vld [vmem:[%s1 + $0x84] sm:$0xff]
  %v32 = vld [vmem:[%s1 + $0x8c] sm:$0xff]
  %v33 = vld [vmem:[%s1 + $0x94] sm:$0xff]
  %v34 = vld [vmem:[%s1 + $0x9c] sm:$0xff]
  %v35 = vld [vmem:[%s1 + $0xa4] sm:$0xff]
  %v36 = vld [vmem:[%s1 + $0xac] sm:$0xff]
  %v37 = vld [vmem:[%s1 + $0xb4] sm:$0xff]
  %v38 = vld [vmem:[%s1 + $0xbc] sm:$0xff]
  %v39 = vld [vmem:[%s1 + $0xc4] sm:$0xff]
  %v40 = vld [vmem:[%s1 + $0xcc] sm:$0xff]
  %v41 = vld [vmem:[%s1 + $0xd4] sm:$0x1]
  %v42 = vld [vmem:[%s0] sm:$0xff]
  %v43 = vlaneseq
  %v44 = vshrl.u32 %v43, 7
  %v45 = vsub.s32 0, %v44
  %v46 = vrot.slane %v17, %v45
  %vm47 = vcmask 130048
  %v49 = vsel %vm47, %v42, 0
  %51 = vmatprep.subr.mxu0 0.0
  %52 = vmatpush1.msra.mxu0 0.0
  %53 = vmatprep.subr.mxu0 0.0
  %54 = vmatpush1.msra.mxu0 0.0
  %55 = vmatprep.subr.mxu0 0.0
  %56 = vmatpush1.msra.mxu0 0.0
  %57 = vmatprep.subr.mxu0 0.0
  %58 = vmatpush1.msra.mxu0 0.0
  %59 = vmatprep.subr.mxu0 0.0
  %60 = vmatpush1.msra.mxu0 0.0
  %61 = vmatprep.subr.mxu0 0.0
  %62 = vmatpush1.msra.mxu0 0.0
  %63 = vmatprep.subr.mxu0 0.0
  %64 = vmatpush1.msra.mxu0 0.0
  %65 = vmatprep.subr.mxu0 0.0
  %66 = vmatpush1.msra.mxu0 0.0
  %67 = vmatprep.subr.mxu0 0.0
  %68 = vmatpush1.msra.mxu0 0.0
  %69 = vmatprep.subr.mxu0 0.0
  %70 = vmatpush1.msra.mxu0 0.0
  %71 = vmatprep.subr.mxu0 0.0
  %72 = vmatpush1.msra.mxu0 0.0
  %73 = vmatprep.subr.mxu0 0.0
  %74 = vmatpush1.msra.mxu0 0.0
  %75 = vmatprep.subr.mxu0 0.0
  %76 = vmatpush1.msra.mxu0 0.0
  %77 = vmatprep.subr.mxu0 0.0
  %78 = vmatpush1.msra.mxu0 0.0
  %79 = vmatprep.subr.mxu0 0.0
  %80 = vmatpush1.msra.mxu0 %v12
  %81 = vmatprep.subr.mxu0 0.0
  %82 = vmatpush1.msra.mxu0 %v11
  %83 = vmatprep.subr.mxu0 0.0
  %84 = vmatpush2.msra.mxu0 0.0
  %85 = vmatprep.subr.mxu0 0.0
  %86 = vmatpush2.msra.mxu0 0.0
  %87 = vmatprep.subr.mxu0 0.0
  %88 = vmatpush2.msra.mxu0 0.0
  %89 = vmatprep.subr.mxu0 0.0
  %90 = vmatpush2.msra.mxu0 0.0
  %91 = vmatprep.subr.mxu0 0.0
  %92 = vmatpush2.msra.mxu0 0.0
  %93 = vmatprep.subr.mxu0 0.0
  %94 = vmatpush2.msra.mxu0 0.0
  %95 = vmatprep.subr.mxu0 0.0
  %96 = vmatpush2.msra.mxu0 0.0
  %97 = vmatprep.subr.mxu0 0.0
  %98 = vmatpush2.msra.mxu0 0.0
  %99 = vmatprep.subr.mxu0 0.0
  %100 = vmatpush2.msra.mxu0 0.0
  %101 = vmatprep.subr.mxu0 0.0
  %102 = vmatpush2.msra.mxu0 0.0
  %103 = vmatprep.subr.mxu0 0.0
  %104 = vmatpush2.msra.mxu0 0.0
  %105 = vmatprep.subr.mxu0 0.0
  %106 = vmatpush2.msra.mxu0 0.0
  %107 = vmatprep.subr.mxu0 0.0
  %108 = vmatpush2.msra.mxu0 0.0
  %109 = vmatprep.subr.mxu0 0.0
  %110 = vmatpush2.msra.mxu0 0.0
  %111 = vmatprep.subr.mxu0 0.0
  %112 = vmatpush2.msra.mxu0 0.0
  %113 = vmatprep.subr.mxu0 0.0
  %114 = vmatpush2.msra.mxu0 0.0
  %115 = vmatprep.mubr.f32.mxu0 0.0
  %116 = vmatmul.mubr.f32.gmra.mxu0 %v49
  %v117 = vpop.f32.mrf.mxu0
  %v118 = vadd.f32 %v46, %v117
  %v119 = vpop.f32.mrf.mxu0
  %120 = vdwg.mxu0
  %vm121 = vcmask 261120
  %v123 = vsel %vm121, %v18, 0
  %125 = vmatprep.subr.mxu0 0.0
  %126 = vmatpush1.msra.mxu0 0.0
  %127 = vmatprep.subr.mxu0 0.0
  %128 = vmatpush1.msra.mxu0 0.0
  %129 = vmatprep.subr.mxu0 0.0
  %130 = vmatpush1.msra.mxu0 0.0
  %131 = vmatprep.subr.mxu0 0.0
  %132 = vmatpush1.msra.mxu0 0.0
  %133 = vmatprep.subr.mxu0 0.0
  %134 = vmatpush1.msra.mxu0 0.0
  %135 = vmatprep.subr.mxu0 0.0
  %136 = vmatpush1.msra.mxu0 0.0
  %137 = vmatprep.subr.mxu0 0.0
  %138 = vmatpush1.msra.mxu0 0.0
  %139 = vmatprep.subr.mxu0 0.0
  %140 = vmatpush1.msra.mxu0 0.0
  %141 = vmatprep.subr.mxu0 0.0
  %142 = vmatpush1.msra.mxu0 0.0
  %143 = vmatprep.subr.mxu0 0.0
  %144 = vmatpush1.msra.mxu0 0.0
  %145 = vmatprep.subr.mxu0 0.0
  %146 = vmatpush1.msra.mxu0 0.0
  %147 = vmatprep.subr.mxu0 0.0
  %148 = vmatpush1.msra.mxu0 0.0
  %149 = vmatprep.subr.mxu0 0.0
  %150 = vmatpush1.msra.mxu0 %v16
  %151 = vmatprep.subr.mxu0 0.0
  %152 = vmatpush1.msra.mxu0 %v15
  %153 = vmatprep.subr.mxu0 0.0
  %154 = vmatpush1.msra.mxu0 %v14
  %155 = vmatprep.subr.mxu0 0.0
  %156 = vmatpush1.msra.mxu0 %v13
  %157 = vmatprep.subr.mxu0 0.0
  %158 = vmatpush2.msra.mxu0 0.0
  %159 = vmatprep.subr.mxu0 0.0
  %160 = vmatpush2.msra.mxu0 0.0
  %161 = vmatprep.subr.mxu0 0.0
  %162 = vmatpush2.msra.mxu0 0.0
  %163 = vmatprep.subr.mxu0 0.0
  %164 = vmatpush2.msra.mxu0 0.0
  %165 = vmatprep.subr.mxu0 0.0
  %166 = vmatpush2.msra.mxu0 0.0
  %167 = vmatprep.subr.mxu0 0.0
  %168 = vmatpush2.msra.mxu0 0.0
  %169 = vmatprep.subr.mxu0 0.0
  %170 = vmatpush2.msra.mxu0 0.0
  %171 = vmatprep.subr.mxu0 0.0
  %172 = vmatpush2.msra.mxu0 0.0
  %173 = vmatprep.subr.mxu0 0.0
  %174 = vmatpush2.msra.mxu0 0.0
  %175 = vmatprep.subr.mxu0 0.0
  %176 = vmatpush2.msra.mxu0 0.0
  %177 = vmatprep.subr.mxu0 0.0
  %178 = vmatpush2.msra.mxu0 0.0
  %179 = vmatprep.subr.mxu0 0.0
  %180 = vmatpush2.msra.mxu0 0.0
  %181 = vmatprep.subr.mxu0 0.0
  %182 = vmatpush2.msra.mxu0 0.0
  %183 = vmatprep.subr.mxu0 0.0
  %184 = vmatpush2.msra.mxu0 0.0
  %185 = vmatprep.subr.mxu0 0.0
  %186 = vmatpush2.msra.mxu0 0.0
  %187 = vmatprep.subr.mxu0 0.0
  %188 = vmatpush2.msra.mxu0 0.0
  %189 = vmatprep.mubr.f32.mxu0 0.0
  %190 = vmatmul.mubr.f32.gmra.mxu0 %v123
  %v191 = vpop.f32.mrf.mxu0
  %v192 = vadd.f32 0.0, %v191
  %v193 = vpop.f32.mrf.mxu0
  %194 = vdwg.mxu0
  %v195 = vadd.f32 %v118, %v192
  %v196 = vtanh.pop %v195
  %v197 = vmul.f32 %v196, 0.5
  %v198 = vadd.f32 %v197, 0.5
  %200 = vrot.lane.b32.xlu0 %v19, 32
  %v201 = vpop.permute.xlu0 %200
  %v203 = vmul.f32 %v198, %v201
  %205 = vrot.lane.b32.xlu0 %v196, 64
  %v206 = vpop.permute.xlu0 %205
  %v208 = vmul.f32 %v198, %v206
  %210 = vrot.lane.b32.xlu0 %v208, 32
  %v211 = vpop.permute.xlu0 %210
  %v213 = vadd.f32 %v203, %v211
  %v214 = vtanh.pop %v213
  %216 = vrot.lane.b32.xlu0 %v214, 64
  %v217 = vpop.permute.xlu0 %216
  %v219 = vmul.f32 %v198, %v217
  %221 = vrot.lane.b32.xlu0 %v219, 32
  %v222 = vpop.permute.xlu0 %221
  %v223 = vsel %vm121, %v222, 0
  %225 = vmatprep.subr.mxu0 0.0
  %226 = vmatpush1.msra.mxu0 0.0
  %227 = vmatprep.subr.mxu0 0.0
  %228 = vmatpush1.msra.mxu0 0.0
  %229 = vmatprep.subr.mxu0 0.0
  %230 = vmatpush1.msra.mxu0 0.0
  %231 = vmatprep.subr.mxu0 0.0
  %232 = vmatpush1.msra.mxu0 0.0
  %233 = vmatprep.subr.mxu0 0.0
  %234 = vmatpush1.msra.mxu0 0.0
  %235 = vmatprep.subr.mxu0 0.0
  %236 = vmatpush1.msra.mxu0 0.0
  %237 = vmatprep.subr.mxu0 0.0
  %238 = vmatpush1.msra.mxu0 0.0
  %239 = vmatprep.subr.mxu0 0.0
  %240 = vmatpush1.msra.mxu0 0.0
  %241 = vmatprep.subr.mxu0 0.0
  %242 = vmatpush1.msra.mxu0 0.0
  %243 = vmatprep.subr.mxu0 0.0
  %244 = vmatpush1.msra.mxu0 0.0
  %245 = vmatprep.subr.mxu0 0.0
  %246 = vmatpush1.msra.mxu0 0.0
  %247 = vmatprep.subr.mxu0 0.0
  %248 = vmatpush1.msra.mxu0 0.0
  %249 = vmatprep.subr.mxu0 0.0
  %250 = vmatpush1.msra.mxu0 %v16
  %251 = vmatprep.subr.mxu0 0.0
  %252 = vmatpush1.msra.mxu0 %v15
  %253 = vmatprep.subr.mxu0 0.0
  %254 = vmatpush1.msra.mxu0 %v14
  %255 = vmatprep.subr.mxu0 0.0
  %256 = vmatpush1.msra.mxu0 %v13
  %257 = vmatprep.subr.mxu0 0.0
  %258 = vmatpush2.msra.mxu0 0.0
  %259 = vmatprep.subr.mxu0 0.0
  %260 = vmatpush2.msra.mxu0 0.0
  %261 = vmatprep.subr.mxu0 0.0
  %262 = vmatpush2.msra.mxu0 0.0
  %263 = vmatprep.subr.mxu0 0.0
  %264 = vmatpush2.msra.mxu0 0.0
  %265 = vmatprep.subr.mxu0 0.0
  %266 = vmatpush2.msra.mxu0 0.0
  %267 = vmatprep.subr.mxu0 0.0
  %268 = vmatpush2.msra.mxu0 0.0
  %269 = vmatprep.subr.mxu0 0.0
  %270 = vmatpush2.msra.mxu0 0.0
  %271 = vmatprep.subr.mxu0 0.0
  %272 = vmatpush2.msra.mxu0 0.0
  %273 = vmatprep.subr.mxu0 0.0
  %274 = vmatpush2.msra.mxu0 0.0
  %275 = vmatprep.subr.mxu0 0.0
  %276 = vmatpush2.msra.mxu0 0.0
  %277 = vmatprep.subr.mxu0 0.0
  %278 = vmatpush2.msra.mxu0 0.0
  %279 = vmatprep.subr.mxu0 0.0
  %280 = vmatpush2.msra.mxu0 0.0
  %281 = vmatprep.subr.mxu0 0.0
  %282 = vmatpush2.msra.mxu0 0.0
  %283 = vmatprep.subr.mxu0 0.0
  %284 = vmatpush2.msra.mxu0 0.0
  %285 = vmatprep.subr.mxu0 0.0
  %286 = vmatpush2.msra.mxu0 0.0
  %287 = vmatprep.subr.mxu0 0.0
  %288 = vmatpush2.msra.mxu0 0.0
  %289 = vmatprep.mubr.f32.mxu0 0.0
  %290 = vmatmul.mubr.f32.gmra.mxu0 %v223
  %v291 = vpop.f32.mrf.mxu0
  %v292 = vadd.f32 0.0, %v291
  %v293 = vpop.f32.mrf.mxu0
  %294 = vdwg.mxu0
  %v296 = vrot.slane %v292, 7
  %v298 = vadd.f32 %v118, %v296
  %v299 = vtanh.pop %v298
  %v300 = vmul.f32 %v299, 0.5
  %v301 = vadd.f32 %v300, 0.5
  %v303 = vrot.slane %v213, 7
  %v305 = vmul.f32 %v301, %v303
  %307 = vrot.lane.b32.xlu0 %v299, 64
  %v308 = vpop.permute.xlu0 %307
  %v310 = vmul.f32 %v301, %v308
  %312 = vrot.lane.b32.xlu0 %v310, 32
  %v313 = vpop.permute.xlu0 %312
  %v315 = vadd.f32 %v305, %v313
  %v316 = vtanh.pop %v315
  %318 = vrot.lane.b32.xlu0 %v316, 64
  %v319 = vpop.permute.xlu0 %318
  %v321 = vmul.f32 %v301, %v319
  %v323 = vrot.slane %v321, 1
  %324 = vrot.lane.b32.xlu0 %v323, 32
  %v325 = vpop.permute.xlu0 %324
  %v326 = vsel %vm121, %v325, 0
  %328 = vmatprep.subr.mxu0 0.0
  %329 = vmatpush1.msra.mxu0 0.0
  %330 = vmatprep.subr.mxu0 0.0
  %331 = vmatpush1.msra.mxu0 0.0
  %332 = vmatprep.subr.mxu0 0.0
  %333 = vmatpush1.msra.mxu0 0.0
  %334 = vmatprep.subr.mxu0 0.0
  %335 = vmatpush1.msra.mxu0 0.0
  %336 = vmatprep.subr.mxu0 0.0
  %337 = vmatpush1.msra.mxu0 0.0
  %338 = vmatprep.subr.mxu0 0.0
  %339 = vmatpush1.msra.mxu0 0.0
  %340 = vmatprep.subr.mxu0 0.0
  %341 = vmatpush1.msra.mxu0 0.0
  %342 = vmatprep.subr.mxu0 0.0
  %343 = vmatpush1.msra.mxu0 0.0
  %344 = vmatprep.subr.mxu0 0.0
  %345 = vmatpush1.msra.mxu0 0.0
  %346 = vmatprep.subr.mxu0 0.0
  %347 = vmatpush1.msra.mxu0 0.0
  %348 = vmatprep.subr.mxu0 0.0
  %349 = vmatpush1.msra.mxu0 0.0
  %350 = vmatprep.subr.mxu0 0.0
  %351 = vmatpush1.msra.mxu0 0.0
  %352 = vmatprep.subr.mxu0 0.0
  %353 = vmatpush1.msra.mxu0 %v16
  %354 = vmatprep.subr.mxu0 0.0
  %355 = vmatpush1.msra.mxu0 %v15
  %356 = vmatprep.subr.mxu0 0.0
  %357 = vmatpush1.msra.mxu0 %v14
  %358 = vmatprep.subr.mxu0 0.0
  %359 = vmatpush1.msra.mxu0 %v13
  %360 = vmatprep.subr.mxu0 0.0
  %361 = vmatpush2.msra.mxu0 0.0
  %362 = vmatprep.subr.mxu0 0.0
  %363 = vmatpush2.msra.mxu0 0.0
  %364 = vmatprep.subr.mxu0 0.0
  %365 = vmatpush2.msra.mxu0 0.0
  %366 = vmatprep.subr.mxu0 0.0
  %367 = vmatpush2.msra.mxu0 0.0
  %368 = vmatprep.subr.mxu0 0.0
  %369 = vmatpush2.msra.mxu0 0.0
  %370 = vmatprep.subr.mxu0 0.0
  %371 = vmatpush2.msra.mxu0 0.0
  %372 = vmatprep.subr.mxu0 0.0
  %373 = vmatpush2.msra.mxu0 0.0
  %374 = vmatprep.subr.mxu0 0.0
  %375 = vmatpush2.msra.mxu0 0.0
  %376 = vmatprep.subr.mxu0 0.0
  %377 = vmatpush2.msra.mxu0 0.0
  %378 = vmatprep.subr.mxu0 0.0
  %379 = vmatpush2.msra.mxu0 0.0
  %380 = vmatprep.subr.mxu0 0.0
  %381 = vmatpush2.msra.mxu0 0.0
  %382 = vmatprep.subr.mxu0 0.0
  %383 = vmatpush2.msra.mxu0 0.0
  %384 = vmatprep.subr.mxu0 0.0
  %385 = vmatpush2.msra.mxu0 0.0
  %386 = vmatprep.subr.mxu0 0.0
  %387 = vmatpush2.msra.mxu0 0.0
  %388 = vmatprep.subr.mxu0 0.0
  %389 = vmatpush2.msra.mxu0 0.0
  %390 = vmatprep.subr.mxu0 0.0
  %391 = vmatpush2.msra.mxu0 0.0
  %392 = vmatprep.mubr.f32.mxu0 0.0
  %393 = vmatmul.mubr.f32.gmra.mxu0 %v326
  %v394 = vpop.f32.mrf.mxu0
  %v395 = vadd.f32 0.0, %v394
  %v396 = vpop.f32.mrf.mxu0
  %397 = vdwg.mxu0
  %v399 = vrot.slane %v395, 6
  %v401 = vadd.f32 %v118, %v399
  %v402 = vtanh.pop %v401
  %v403 = vmul.f32 %v402, 0.5
  %v404 = vadd.f32 %v403, 0.5
  %v406 = vrot.slane %v315, 7
  %v408 = vmul.f32 %v404, %v406
  %410 = vrot.lane.b32.xlu0 %v402, 64
  %v411 = vpop.permute.xlu0 %410
  %v413 = vmul.f32 %v404, %v411
  %415 = vrot.lane.b32.xlu0 %v413, 32
  %v416 = vpop.permute.xlu0 %415
  %v418 = vadd.f32 %v408, %v416
  %v419 = vtanh.pop %v418
  %421 = vrot.lane.b32.xlu0 %v419, 64
  %v422 = vpop.permute.xlu0 %421
  %v424 = vmul.f32 %v404, %v422
  %v426 = vrot.slane %v424, 2
  %427 = vrot.lane.b32.xlu0 %v426, 32
  %v428 = vpop.permute.xlu0 %427
  %v429 = vsel %vm121, %v428, 0
  %431 = vmatprep.subr.mxu0 0.0
  %432 = vmatpush1.msra.mxu0 0.0
  %433 = vmatprep.subr.mxu0 0.0
  %434 = vmatpush1.msra.mxu0 0.0
  %435 = vmatprep.subr.mxu0 0.0
  %436 = vmatpush1.msra.mxu0 0.0
  %437 = vmatprep.subr.mxu0 0.0
  %438 = vmatpush1.msra.mxu0 0.0
  %439 = vmatprep.subr.mxu0 0.0
  %440 = vmatpush1.msra.mxu0 0.0
  %441 = vmatprep.subr.mxu0 0.0
  %442 = vmatpush1.msra.mxu0 0.0
  %443 = vmatprep.subr.mxu0 0.0
  %444 = vmatpush1.msra.mxu0 0.0
  %445 = vmatprep.subr.mxu0 0.0
  %446 = vmatpush1.msra.mxu0 0.0
  %447 = vmatprep.subr.mxu0 0.0
  %448 = vmatpush1.msra.mxu0 0.0
  %449 = vmatprep.subr.mxu0 0.0
  %450 = vmatpush1.msra.mxu0 0.0
  %451 = vmatprep.subr.mxu0 0.0
  %452 = vmatpush1.msra.mxu0 0.0
  %453 = vmatprep.subr.mxu0 0.0
  %454 = vmatpush1.msra.mxu0 0.0
  %455 = vmatprep.subr.mxu0 0.0
  %456 = vmatpush1.msra.mxu0 %v16
  %457 = vmatprep.subr.mxu0 0.0
  %458 = vmatpush1.msra.mxu0 %v15
  %459 = vmatprep.subr.mxu0 0.0
  %460 = vmatpush1.msra.mxu0 %v14
  %461 = vmatprep.subr.mxu0 0.0
  %462 = vmatpush1.msra.mxu0 %v13
  %463 = vmatprep.subr.mxu0 0.0
  %464 = vmatpush2.msra.mxu0 0.0
  %465 = vmatprep.subr.mxu0 0.0
  %466 = vmatpush2.msra.mxu0 0.0
  %467 = vmatprep.subr.mxu0 0.0
  %468 = vmatpush2.msra.mxu0 0.0
  %469 = vmatprep.subr.mxu0 0.0
  %470 = vmatpush2.msra.mxu0 0.0
  %471 = vmatprep.subr.mxu0 0.0
  %472 = vmatpush2.msra.mxu0 0.0
  %473 = vmatprep.subr.mxu0 0.0
  %474 = vmatpush2.msra.mxu0 0.0
  %475 = vmatprep.subr.mxu0 0.0
  %476 = vmatpush2.msra.mxu0 0.0
  %477 = vmatprep.subr.mxu0 0.0
  %478 = vmatpush2.msra.mxu0 0.0
  %479 = vmatprep.subr.mxu0 0.0
  %480 = vmatpush2.msra.mxu0 0.0
  %481 = vmatprep.subr.mxu0 0.0
  %482 = vmatpush2.msra.mxu0 0.0
  %483 = vmatprep.subr.mxu0 0.0
  %484 = vmatpush2.msra.mxu0 0.0
  %485 = vmatprep.subr.mxu0 0.0
  %486 = vmatpush2.msra.mxu0 0.0
  %487 = vmatprep.subr.mxu0 0.0
  %488 = vmatpush2.msra.mxu0 0.0
  %489 = vmatprep.subr.mxu0 0.0
  %490 = vmatpush2.msra.mxu0 0.0
  %491 = vmatprep.subr.mxu0 0.0
  %492 = vmatpush2.msra.mxu0 0.0
  %493 = vmatprep.subr.mxu0 0.0
  %494 = vmatpush2.msra.mxu0 0.0
  %495 = vmatprep.mubr.f32.mxu0 0.0
  %496 = vmatmul.mubr.f32.gmra.mxu0 %v429
  %v497 = vpop.f32.mrf.mxu0
  %v498 = vadd.f32 0.0, %v497
  %v499 = vpop.f32.mrf.mxu0
  %500 = vdwg.mxu0
  %v502 = vrot.slane %v498, 5
  %v504 = vadd.f32 %v118, %v502
  %v505 = vtanh.pop %v504
  %v506 = vmul.f32 %v505, 0.5
  %v507 = vadd.f32 %v506, 0.5
  %v509 = vrot.slane %v418, 7
  %v511 = vmul.f32 %v507, %v509
  %513 = vrot.lane.b32.xlu0 %v505, 64
  %v514 = vpop.permute.xlu0 %513
  %v516 = vmul.f32 %v507, %v514
  %518 = vrot.lane.b32.xlu0 %v516, 32
  %v519 = vpop.permute.xlu0 %518
  %v521 = vadd.f32 %v511, %v519
  %v522 = vtanh.pop %v521
  %524 = vrot.lane.b32.xlu0 %v522, 64
  %v525 = vpop.permute.xlu0 %524
  %v527 = vmul.f32 %v507, %v525
  %v529 = vrot.slane %v527, 3
  %530 = vrot.lane.b32.xlu0 %v529, 32
  %v531 = vpop.permute.xlu0 %530
  %v532 = vsel %vm121, %v531, 0
  %534 = vmatprep.subr.mxu0 0.0
  %535 = vmatpush1.msra.mxu0 0.0
  %536 = vmatprep.subr.mxu0 0.0
  %537 = vmatpush1.msra.mxu0 0.0
  %538 = vmatprep.subr.mxu0 0.0
  %539 = vmatpush1.msra.mxu0 0.0
  %540 = vmatprep.subr.mxu0 0.0
  %541 = vmatpush1.msra.mxu0 0.0
  %542 = vmatprep.subr.mxu0 0.0
  %543 = vmatpush1.msra.mxu0 0.0
  %544 = vmatprep.subr.mxu0 0.0
  %545 = vmatpush1.msra.mxu0 0.0
  %546 = vmatprep.subr.mxu0 0.0
  %547 = vmatpush1.msra.mxu0 0.0
  %548 = vmatprep.subr.mxu0 0.0
  %549 = vmatpush1.msra.mxu0 0.0
  %550 = vmatprep.subr.mxu0 0.0
  %551 = vmatpush1.msra.mxu0 0.0
  %552 = vmatprep.subr.mxu0 0.0
  %553 = vmatpush1.msra.mxu0 0.0
  %554 = vmatprep.subr.mxu0 0.0
  %555 = vmatpush1.msra.mxu0 0.0
  %556 = vmatprep.subr.mxu0 0.0
  %557 = vmatpush1.msra.mxu0 0.0
  %558 = vmatprep.subr.mxu0 0.0
  %559 = vmatpush1.msra.mxu0 %v16
  %560 = vmatprep.subr.mxu0 0.0
  %561 = vmatpush1.msra.mxu0 %v15
  %562 = vmatprep.subr.mxu0 0.0
  %563 = vmatpush1.msra.mxu0 %v14
  %564 = vmatprep.subr.mxu0 0.0
  %565 = vmatpush1.msra.mxu0 %v13
  %566 = vmatprep.subr.mxu0 0.0
  %567 = vmatpush2.msra.mxu0 0.0
  %568 = vmatprep.subr.mxu0 0.0
  %569 = vmatpush2.msra.mxu0 0.0
  %570 = vmatprep.subr.mxu0 0.0
  %571 = vmatpush2.msra.mxu0 0.0
  %572 = vmatprep.subr.mxu0 0.0
  %573 = vmatpush2.msra.mxu0 0.0
  %574 = vmatprep.subr.mxu0 0.0
  %575 = vmatpush2.msra.mxu0 0.0
  %576 = vmatprep.subr.mxu0 0.0
  %577 = vmatpush2.msra.mxu0 0.0
  %578 = vmatprep.subr.mxu0 0.0
  %579 = vmatpush2.msra.mxu0 0.0
  %580 = vmatprep.subr.mxu0 0.0
  %581 = vmatpush2.msra.mxu0 0.0
  %582 = vmatprep.subr.mxu0 0.0
  %583 = vmatpush2.msra.mxu0 0.0
  %584 = vmatprep.subr.mxu0 0.0
  %585 = vmatpush2.msra.mxu0 0.0
  %586 = vmatprep.subr.mxu0 0.0
  %587 = vmatpush2.msra.mxu0 0.0
  %588 = vmatprep.subr.mxu0 0.0
  %589 = vmatpush2.msra.mxu0 0.0
  %590 = vmatprep.subr.mxu0 0.0
  %591 = vmatpush2.msra.mxu0 0.0
  %592 = vmatprep.subr.mxu0 0.0
  %593 = vmatpush2.msra.mxu0 0.0
  %594 = vmatprep.subr.mxu0 0.0
  %595 = vmatpush2.msra.mxu0 0.0
  %596 = vmatprep.subr.mxu0 0.0
  %597 = vmatpush2.msra.mxu0 0.0
  %598 = vmatprep.mubr.f32.mxu0 0.0
  %599 = vmatmul.mubr.f32.gmra.mxu0 %v532
  %v600 = vpop.f32.mrf.mxu0
  %v601 = vadd.f32 0.0, %v600
  %v602 = vpop.f32.mrf.mxu0
  %603 = vdwg.mxu0
  %v605 = vrot.slane %v601, 4
  %v607 = vadd.f32 %v118, %v605
  %v608 = vtanh.pop %v607
  %v609 = vmul.f32 %v608, 0.5
  %v610 = vadd.f32 %v609, 0.5
  %v612 = vrot.slane %v521, 7
  %v614 = vmul.f32 %v610, %v612
  %616 = vrot.lane.b32.xlu0 %v608, 64
  %v617 = vpop.permute.xlu0 %616
  %v619 = vmul.f32 %v610, %v617
  %621 = vrot.lane.b32.xlu0 %v619, 32
  %v622 = vpop.permute.xlu0 %621
  %v624 = vadd.f32 %v614, %v622
  %v625 = vtanh.pop %v624
  %627 = vrot.lane.b32.xlu0 %v625, 64
  %v628 = vpop.permute.xlu0 %627
  %v630 = vmul.f32 %v610, %v628
  %v632 = vrot.slane %v630, 4
  %633 = vrot.lane.b32.xlu0 %v632, 32
  %v634 = vpop.permute.xlu0 %633
  %v635 = vsel %vm121, %v634, 0
  %637 = vmatprep.subr.mxu0 0.0
  %638 = vmatpush1.msra.mxu0 0.0
  %639 = vmatprep.subr.mxu0 0.0
  %640 = vmatpush1.msra.mxu0 0.0
  %641 = vmatprep.subr.mxu0 0.0
  %642 = vmatpush1.msra.mxu0 0.0
  %643 = vmatprep.subr.mxu0 0.0
  %644 = vmatpush1.msra.mxu0 0.0
  %645 = vmatprep.subr.mxu0 0.0
  %646 = vmatpush1.msra.mxu0 0.0
  %647 = vmatprep.subr.mxu0 0.0
  %648 = vmatpush1.msra.mxu0 0.0
  %649 = vmatprep.subr.mxu0 0.0
  %650 = vmatpush1.msra.mxu0 0.0
  %651 = vmatprep.subr.mxu0 0.0
  %652 = vmatpush1.msra.mxu0 0.0
  %653 = vmatprep.subr.mxu0 0.0
  %654 = vmatpush1.msra.mxu0 0.0
  %655 = vmatprep.subr.mxu0 0.0
  %656 = vmatpush1.msra.mxu0 0.0
  %657 = vmatprep.subr.mxu0 0.0
  %658 = vmatpush1.msra.mxu0 0.0
  %659 = vmatprep.subr.mxu0 0.0
  %660 = vmatpush1.msra.mxu0 0.0
  %661 = vmatprep.subr.mxu0 0.0
  %662 = vmatpush1.msra.mxu0 %v16
  %663 = vmatprep.subr.mxu0 0.0
  %664 = vmatpush1.msra.mxu0 %v15
  %665 = vmatprep.subr.mxu0 0.0
  %666 = vmatpush1.msra.mxu0 %v14
  %667 = vmatprep.subr.mxu0 0.0
  %668 = vmatpush1.msra.mxu0 %v13
  %669 = vmatprep.subr.mxu0 0.0
  %670 = vmatpush2.msra.mxu0 0.0
  %671 = vmatprep.subr.mxu0 0.0
  %672 = vmatpush2.msra.mxu0 0.0
  %673 = vmatprep.subr.mxu0 0.0
  %674 = vmatpush2.msra.mxu0 0.0
  %675 = vmatprep.subr.mxu0 0.0
  %676 = vmatpush2.msra.mxu0 0.0
  %677 = vmatprep.subr.mxu0 0.0
  %678 = vmatpush2.msra.mxu0 0.0
  %679 = vmatprep.subr.mxu0 0.0
  %680 = vmatpush2.msra.mxu0 0.0
  %681 = vmatprep.subr.mxu0 0.0
  %682 = vmatpush2.msra.mxu0 0.0
  %683 = vmatprep.subr.mxu0 0.0
  %684 = vmatpush2.msra.mxu0 0.0
  %685 = vmatprep.subr.mxu0 0.0
  %686 = vmatpush2.msra.mxu0 0.0
  %687 = vmatprep.subr.mxu0 0.0
  %688 = vmatpush2.msra.mxu0 0.0
  %689 = vmatprep.subr.mxu0 0.0
  %690 = vmatpush2.msra.mxu0 0.0
  %691 = vmatprep.subr.mxu0 0.0
  %692 = vmatpush2.msra.mxu0 0.0
  %693 = vmatprep.subr.mxu0 0.0
  %694 = vmatpush2.msra.mxu0 0.0
  %695 = vmatprep.subr.mxu0 0.0
  %696 = vmatpush2.msra.mxu0 0.0
  %697 = vmatprep.subr.mxu0 0.0
  %698 = vmatpush2.msra.mxu0 0.0
  %699 = vmatprep.subr.mxu0 0.0
  %700 = vmatpush2.msra.mxu0 0.0
  %701 = vmatprep.mubr.f32.mxu0 0.0
  %702 = vmatmul.mubr.f32.gmra.mxu0 %v635
  %v703 = vpop.f32.mrf.mxu0
  %v704 = vadd.f32 0.0, %v703
  %v705 = vpop.f32.mrf.mxu0
  %706 = vdwg.mxu0
  %v708 = vrot.slane %v704, 3
  %v710 = vadd.f32 %v118, %v708
  %v711 = vtanh.pop %v710
  %v712 = vmul.f32 %v711, 0.5
  %v713 = vadd.f32 %v712, 0.5
  %v715 = vrot.slane %v624, 7
  %v717 = vmul.f32 %v713, %v715
  %719 = vrot.lane.b32.xlu0 %v711, 64
  %v720 = vpop.permute.xlu0 %719
  %v722 = vmul.f32 %v713, %v720
  %724 = vrot.lane.b32.xlu0 %v722, 32
  %v725 = vpop.permute.xlu0 %724
  %v727 = vadd.f32 %v717, %v725
  %v728 = vtanh.pop %v727
  %730 = vrot.lane.b32.xlu0 %v728, 64
  %v731 = vpop.permute.xlu0 %730
  %v733 = vmul.f32 %v713, %v731
  %v735 = vrot.slane %v733, 5
  %736 = vrot.lane.b32.xlu0 %v735, 32
  %v737 = vpop.permute.xlu0 %736
  %v738 = vsel %vm121, %v737, 0
  %740 = vmatprep.subr.mxu0 0.0
  %741 = vmatpush1.msra.mxu0 0.0
  %742 = vmatprep.subr.mxu0 0.0
  %743 = vmatpush1.msra.mxu0 0.0
  %744 = vmatprep.subr.mxu0 0.0
  %745 = vmatpush1.msra.mxu0 0.0
  %746 = vmatprep.subr.mxu0 0.0
  %747 = vmatpush1.msra.mxu0 0.0
  %748 = vmatprep.subr.mxu0 0.0
  %749 = vmatpush1.msra.mxu0 0.0
  %750 = vmatprep.subr.mxu0 0.0
  %751 = vmatpush1.msra.mxu0 0.0
  %752 = vmatprep.subr.mxu0 0.0
  %753 = vmatpush1.msra.mxu0 0.0
  %754 = vmatprep.subr.mxu0 0.0
  %755 = vmatpush1.msra.mxu0 0.0
  %756 = vmatprep.subr.mxu0 0.0
  %757 = vmatpush1.msra.mxu0 0.0
  %758 = vmatprep.subr.mxu0 0.0
  %759 = vmatpush1.msra.mxu0 0.0
  %760 = vmatprep.subr.mxu0 0.0
  %761 = vmatpush1.msra.mxu0 0.0
  %762 = vmatprep.subr.mxu0 0.0
  %763 = vmatpush1.msra.mxu0 0.0
  %764 = vmatprep.subr.mxu0 0.0
  %765 = vmatpush1.msra.mxu0 %v16
  %766 = vmatprep.subr.mxu0 0.0
  %767 = vmatpush1.msra.mxu0 %v15
  %768 = vmatprep.subr.mxu0 0.0
  %769 = vmatpush1.msra.mxu0 %v14
  %770 = vmatprep.subr.mxu0 0.0
  %771 = vmatpush1.msra.mxu0 %v13
  %772 = vmatprep.subr.mxu0 0.0
  %773 = vmatpush2.msra.mxu0 0.0
  %774 = vmatprep.subr.mxu0 0.0
  %775 = vmatpush2.msra.mxu0 0.0
  %776 = vmatprep.subr.mxu0 0.0
  %777 = vmatpush2.msra.mxu0 0.0
  %778 = vmatprep.subr.mxu0 0.0
  %779 = vmatpush2.msra.mxu0 0.0
  %780 = vmatprep.subr.mxu0 0.0
  %781 = vmatpush2.msra.mxu0 0.0
  %782 = vmatprep.subr.mxu0 0.0
  %783 = vmatpush2.msra.mxu0 0.0
  %784 = vmatprep.subr.mxu0 0.0
  %785 = vmatpush2.msra.mxu0 0.0
  %786 = vmatprep.subr.mxu0 0.0
  %787 = vmatpush2.msra.mxu0 0.0
  %788 = vmatprep.subr.mxu0 0.0
  %789 = vmatpush2.msra.mxu0 0.0
  %790 = vmatprep.subr.mxu0 0.0
  %791 = vmatpush2.msra.mxu0 0.0
  %792 = vmatprep.subr.mxu0 0.0
  %793 = vmatpush2.msra.mxu0 0.0
  %794 = vmatprep.subr.mxu0 0.0
  %795 = vmatpush2.msra.mxu0 0.0
  %796 = vmatprep.subr.mxu0 0.0
  %797 = vmatpush2.msra.mxu0 0.0
  %798 = vmatprep.subr.mxu0 0.0
  %799 = vmatpush2.msra.mxu0 0.0
  %800 = vmatprep.subr.mxu0 0.0
  %801 = vmatpush2.msra.mxu0 0.0
  %802 = vmatprep.subr.mxu0 0.0
  %803 = vmatpush2.msra.mxu0 0.0
  %804 = vmatprep.mubr.f32.mxu0 0.0
  %805 = vmatmul.mubr.f32.gmra.mxu0 %v738
  %v806 = vpop.f32.mrf.mxu0
  %v807 = vadd.f32 0.0, %v806
  %v808 = vpop.f32.mrf.mxu0
  %809 = vdwg.mxu0
  %v811 = vrot.slane %v807, 2
  %v813 = vadd.f32 %v118, %v811
  %v814 = vtanh.pop %v813
  %v815 = vmul.f32 %v814, 0.5
  %v816 = vadd.f32 %v815, 0.5
  %v818 = vrot.slane %v727, 7
  %v820 = vmul.f32 %v816, %v818
  %822 = vrot.lane.b32.xlu0 %v814, 64
  %v823 = vpop.permute.xlu0 %822
  %v825 = vmul.f32 %v816, %v823
  %827 = vrot.lane.b32.xlu0 %v825, 32
  %v828 = vpop.permute.xlu0 %827
  %v830 = vadd.f32 %v820, %v828
  %v831 = vtanh.pop %v830
  %833 = vrot.lane.b32.xlu0 %v831, 64
  %v834 = vpop.permute.xlu0 %833
  %v836 = vmul.f32 %v816, %v834
  %v838 = vrot.slane %v836, 6
  %839 = vrot.lane.b32.xlu0 %v838, 32
  %v840 = vpop.permute.xlu0 %839
  %v841 = vsel %vm121, %v840, 0
  %843 = vmatprep.subr.mxu0 0.0
  %844 = vmatpush1.msra.mxu0 0.0
  %845 = vmatprep.subr.mxu0 0.0
  %846 = vmatpush1.msra.mxu0 0.0
  %847 = vmatprep.subr.mxu0 0.0
  %848 = vmatpush1.msra.mxu0 0.0
  %849 = vmatprep.subr.mxu0 0.0
  %850 = vmatpush1.msra.mxu0 0.0
  %851 = vmatprep.subr.mxu0 0.0
  %852 = vmatpush1.msra.mxu0 0.0
  %853 = vmatprep.subr.mxu0 0.0
  %854 = vmatpush1.msra.mxu0 0.0
  %855 = vmatprep.subr.mxu0 0.0
  %856 = vmatpush1.msra.mxu0 0.0
  %857 = vmatprep.subr.mxu0 0.0
  %858 = vmatpush1.msra.mxu0 0.0
  %859 = vmatprep.subr.mxu0 0.0
  %860 = vmatpush1.msra.mxu0 0.0
  %861 = vmatprep.subr.mxu0 0.0
  %862 = vmatpush1.msra.mxu0 0.0
  %863 = vmatprep.subr.mxu0 0.0
  %864 = vmatpush1.msra.mxu0 0.0
  %865 = vmatprep.subr.mxu0 0.0
  %866 = vmatpush1.msra.mxu0 0.0
  %867 = vmatprep.subr.mxu0 0.0
  %868 = vmatpush1.msra.mxu0 %v16
  %869 = vmatprep.subr.mxu0 0.0
  %870 = vmatpush1.msra.mxu0 %v15
  %871 = vmatprep.subr.mxu0 0.0
  %872 = vmatpush1.msra.mxu0 %v14
  %873 = vmatprep.subr.mxu0 0.0
  %874 = vmatpush1.msra.mxu0 %v13
  %875 = vmatprep.subr.mxu0 0.0
  %876 = vmatpush2.msra.mxu0 0.0
  %877 = vmatprep.subr.mxu0 0.0
  %878 = vmatpush2.msra.mxu0 0.0
  %879 = vmatprep.subr.mxu0 0.0
  %880 = vmatpush2.msra.mxu0 0.0
  %881 = vmatprep.subr.mxu0 0.0
  %882 = vmatpush2.msra.mxu0 0.0
  %883 = vmatprep.subr.mxu0 0.0
  %884 = vmatpush2.msra.mxu0 0.0
  %885 = vmatprep.subr.mxu0 0.0
  %886 = vmatpush2.msra.mxu0 0.0
  %887 = vmatprep.subr.mxu0 0.0
  %888 = vmatpush2.msra.mxu0 0.0
  %889 = vmatprep.subr.mxu0 0.0
  %890 = vmatpush2.msra.mxu0 0.0
  %891 = vmatprep.subr.mxu0 0.0
  %892 = vmatpush2.msra.mxu0 0.0
  %893 = vmatprep.subr.mxu0 0.0
  %894 = vmatpush2.msra.mxu0 0.0
  %895 = vmatprep.subr.mxu0 0.0
  %896 = vmatpush2.msra.mxu0 0.0
  %897 = vmatprep.subr.mxu0 0.0
  %898 = vmatpush2.msra.mxu0 0.0
  %899 = vmatprep.subr.mxu0 0.0
  %900 = vmatpush2.msra.mxu0 0.0
  %901 = vmatprep.subr.mxu0 0.0
  %902 = vmatpush2.msra.mxu0 0.0
  %903 = vmatprep.subr.mxu0 0.0
  %904 = vmatpush2.msra.mxu0 0.0
  %905 = vmatprep.subr.mxu0 0.0
  %906 = vmatpush2.msra.mxu0 0.0
  %907 = vmatprep.mubr.f32.mxu0 0.0
  %908 = vmatmul.mubr.f32.gmra.mxu0 %v841
  %v909 = vpop.f32.mrf.mxu0
  %v910 = vadd.f32 0.0, %v909
  %v911 = vpop.f32.mrf.mxu0
  %912 = vdwg.mxu0
  %v914 = vrot.slane %v910, 1
  %v916 = vadd.f32 %v118, %v914
  %v917 = vtanh.pop %v916
  %v918 = vmul.f32 %v917, 0.5
  %v919 = vadd.f32 %v918, 0.5
  %v921 = vrot.slane %v830, 7
  %v923 = vmul.f32 %v919, %v921
  %925 = vrot.lane.b32.xlu0 %v917, 64
  %v926 = vpop.permute.xlu0 %925
  %v928 = vmul.f32 %v919, %v926
  %930 = vrot.lane.b32.xlu0 %v928, 32
  %v931 = vpop.permute.xlu0 %930
  %v933 = vadd.f32 %v923, %v931
  %v934 = vtanh.pop %v933
  %936 = vrot.lane.b32.xlu0 %v934, 64
  %v937 = vpop.permute.xlu0 %936
  %v939 = vmul.f32 %v919, %v937
  %vm940 = vcmask 1040384
  %v941 = vsel %vm940, %v219, %v321
  %vm942 = vcmask 1041408
  %v943 = vsel %vm942, %v941, %v424
  %vm944 = vcmask 1042432
  %v945 = vsel %vm944, %v943, %v527
  %vm946 = vcmask 1043456
  %v947 = vsel %vm946, %v945, %v630
  %vm948 = vcmask 1044480
  %v949 = vsel %vm948, %v947, %v733
  %vm950 = vcmask 1045504
  %v951 = vsel %vm950, %v949, %v836
  %vm952 = vcmask 1046528
  %v953 = vsel %vm952, %v951, %v939
  %v954 = vlaneseq
  %v955 = vshrl.u32 %v954, 7
  %v956 = vsub.s32 0, %v955
  %v957 = vrot.slane %v24, %v956
  %959 = vrot.lane.b32.xlu0 %v953, 32
  %v960 = vpop.permute.xlu0 %959
  %v961 = vsel %vm121, %v960, 0
  %963 = vmatprep.subr.mxu0 0.0
  %964 = vmatpush1.msra.mxu0 0.0
  %965 = vmatprep.subr.mxu0 0.0
  %966 = vmatpush1.msra.mxu0 0.0
  %967 = vmatprep.subr.mxu0 0.0
  %968 = vmatpush1.msra.mxu0 0.0
  %969 = vmatprep.subr.mxu0 0.0
  %970 = vmatpush1.msra.mxu0 0.0
  %971 = vmatprep.subr.mxu0 0.0
  %972 = vmatpush1.msra.mxu0 0.0
  %973 = vmatprep.subr.mxu0 0.0
  %974 = vmatpush1.msra.mxu0 0.0
  %975 = vmatprep.subr.mxu0 0.0
  %976 = vmatpush1.msra.mxu0 0.0
  %977 = vmatprep.subr.mxu0 0.0
  %978 = vmatpush1.msra.mxu0 0.0
  %979 = vmatprep.subr.mxu0 0.0
  %980 = vmatpush1.msra.mxu0 0.0
  %981 = vmatprep.subr.mxu0 0.0
  %982 = vmatpush1.msra.mxu0 0.0
  %983 = vmatprep.subr.mxu0 0.0
  %984 = vmatpush1.msra.mxu0 0.0
  %985 = vmatprep.subr.mxu0 0.0
  %986 = vmatpush1.msra.mxu0 0.0
  %987 = vmatprep.subr.mxu0 0.0
  %988 = vmatpush1.msra.mxu0 %v23
  %989 = vmatprep.subr.mxu0 0.0
  %990 = vmatpush1.msra.mxu0 %v22
  %991 = vmatprep.subr.mxu0 0.0
  %992 = vmatpush1.msra.mxu0 %v21
  %993 = vmatprep.subr.mxu0 0.0
  %994 = vmatpush1.msra.mxu0 %v20
  %995 = vmatprep.subr.mxu0 0.0
  %996 = vmatpush2.msra.mxu0 0.0
  %997 = vmatprep.subr.mxu0 0.0
  %998 = vmatpush2.msra.mxu0 0.0
  %999 = vmatprep.subr.mxu0 0.0
  %1000 = vmatpush2.msra.mxu0 0.0
  %1001 = vmatprep.subr.mxu0 0.0
  %1002 = vmatpush2.msra.mxu0 0.0
  %1003 = vmatprep.subr.mxu0 0.0
  %1004 = vmatpush2.msra.mxu0 0.0
  %1005 = vmatprep.subr.mxu0 0.0
  %1006 = vmatpush2.msra.mxu0 0.0
  %1007 = vmatprep.subr.mxu0 0.0
  %1008 = vmatpush2.msra.mxu0 0.0
  %1009 = vmatprep.subr.mxu0 0.0
  %1010 = vmatpush2.msra.mxu0 0.0
  %1011 = vmatprep.subr.mxu0 0.0
  %1012 = vmatpush2.msra.mxu0 0.0
  %1013 = vmatprep.subr.mxu0 0.0
  %1014 = vmatpush2.msra.mxu0 0.0
  %1015 = vmatprep.subr.mxu0 0.0
  %1016 = vmatpush2.msra.mxu0 0.0
  %1017 = vmatprep.subr.mxu0 0.0
  %1018 = vmatpush2.msra.mxu0 0.0
  %1019 = vmatprep.subr.mxu0 0.0
  %1020 = vmatpush2.msra.mxu0 0.0
  %1021 = vmatprep.subr.mxu0 0.0
  %1022 = vmatpush2.msra.mxu0 0.0
  %1023 = vmatprep.subr.mxu0 0.0
  %1024 = vmatpush2.msra.mxu0 0.0
  %1025 = vmatprep.subr.mxu0 0.0
  %1026 = vmatpush2.msra.mxu0 0.0
  %1027 = vmatprep.mubr.f32.mxu0 0.0
  %1028 = vmatmul.mubr.f32.gmra.mxu0 %v961
  %v1029 = vpop.f32.mrf.mxu0
  %v1030 = vadd.f32 %v957, %v1029
  %v1031 = vpop.f32.mrf.mxu0
  %1032 = vdwg.mxu0
  %v1033 = vmax.f32 %v1030, 0.0
  %v1034 = vlaneseq
  %v1035 = vshrl.u32 %v1034, 7
  %v1036 = vsub.s32 0, %v1035
  %v1037 = vrot.slane %v41, %v1036
  %1038 = vmatprep.subr.mxu0 0.0
  %1039 = vmatpush1.msra.mxu0 %v40
  %1040 = vmatprep.subr.mxu0 0.0
  %1041 = vmatpush1.msra.mxu0 %v39
  %1042 = vmatprep.subr.mxu0 0.0
  %1043 = vmatpush1.msra.mxu0 %v38
  %1044 = vmatprep.subr.mxu0 0.0
  %1045 = vmatpush1.msra.mxu0 %v37
  %1046 = vmatprep.subr.mxu0 0.0
  %1047 = vmatpush1.msra.mxu0 %v36
  %1048 = vmatprep.subr.mxu0 0.0
  %1049 = vmatpush1.msra.mxu0 %v35
  %1050 = vmatprep.subr.mxu0 0.0
  %1051 = vmatpush1.msra.mxu0 %v34
  %1052 = vmatprep.subr.mxu0 0.0
  %1053 = vmatpush1.msra.mxu0 %v33
  %1054 = vmatprep.subr.mxu0 0.0
  %1055 = vmatpush1.msra.mxu0 %v32
  %1056 = vmatprep.subr.mxu0 0.0
  %1057 = vmatpush1.msra.mxu0 %v31
  %1058 = vmatprep.subr.mxu0 0.0
  %1059 = vmatpush1.msra.mxu0 %v30
  %1060 = vmatprep.subr.mxu0 0.0
  %1061 = vmatpush1.msra.mxu0 %v29
  %1062 = vmatprep.subr.mxu0 0.0
  %1063 = vmatpush1.msra.mxu0 %v28
  %1064 = vmatprep.subr.mxu0 0.0
  %1065 = vmatpush1.msra.mxu0 %v27
  %1066 = vmatprep.subr.mxu0 0.0
  %1067 = vmatpush1.msra.mxu0 %v26
  %1068 = vmatprep.subr.mxu0 0.0
  %1069 = vmatpush1.msra.mxu0 %v25
  %1070 = vmatprep.subr.mxu0 0.0
  %1071 = vmatpush2.msra.mxu0 0.0
  %1072 = vmatprep.subr.mxu0 0.0
  %1073 = vmatpush2.msra.mxu0 0.0
  %1074 = vmatprep.subr.mxu0 0.0
  %1075 = vmatpush2.msra.mxu0 0.0
  %1076 = vmatprep.subr.mxu0 0.0
  %1077 = vmatpush2.msra.mxu0 0.0
  %1078 = vmatprep.subr.mxu0 0.0
  %1079 = vmatpush2.msra.mxu0 0.0
  %1080 = vmatprep.subr.mxu0 0.0
  %1081 = vmatpush2.msra.mxu0 0.0
  %1082 = vmatprep.subr.mxu0 0.0
  %1083 = vmatpush2.msra.mxu0 0.0
  %1084 = vmatprep.subr.mxu0 0.0
  %1085 = vmatpush2.msra.mxu0 0.0
  %1086 = vmatprep.subr.mxu0 0.0
  %1087 = vmatpush2.msra.mxu0 0.0
  %1088 = vmatprep.subr.mxu0 0.0
  %1089 = vmatpush2.msra.mxu0 0.0
  %1090 = vmatprep.subr.mxu0 0.0
  %1091 = vmatpush2.msra.mxu0 0.0
  %1092 = vmatprep.subr.mxu0 0.0
  %1093 = vmatpush2.msra.mxu0 0.0
  %1094 = vmatprep.subr.mxu0 0.0
  %1095 = vmatpush2.msra.mxu0 0.0
  %1096 = vmatprep.subr.mxu0 0.0
  %1097 = vmatpush2.msra.mxu0 0.0
  %1098 = vmatprep.subr.mxu0 0.0
  %1099 = vmatpush2.msra.mxu0 0.0
  %1100 = vmatprep.subr.mxu0 0.0
  %1101 = vmatpush2.msra.mxu0 0.0
  %1102 = vmatprep.mubr.f32.mxu0 0.0
  %1103 = vmatmul.mubr.f32.gmra.mxu0 %v1033
  %v1104 = vpop.f32.mrf.mxu0
  %v1105 = vadd.f32 %v1037, %v1104
  %v1106 = vpop.f32.mrf.mxu0
  %1107 = vdwg.mxu0
  %v1108 = vrot.slane %v1105, 4
  %v1109 = vadd.f32 %v1105, %v1108
  %v1110 = vrot.slane %v1109, 2
  %v1111 = vadd.f32 %v1109, %v1110
  %v1112 = vrot.slane %v1111, 1
  %v1113 = vadd.f32 %v1111, %v1112
  %v1114 = vrcp.pop 8.0
  %v1115 = vmul.f32 %v1113, %v1114
  %1116 = vst [vmem:[%s2] sm:$0xff] %v1105
  %1117 = vst [vmem:[%s2 + $0x8] sm:$0x1] %v1115
  // Predicated region
  $region10: #{lstm_instance_space_forward.1} parent=0 // pred_check
    _
  $region11: #{lstm_instance_space_forward.1} parent=0 // pred_check_branch
    %1119 = sbr.rel (0) target = $region13
  $region12: #{lstm_instance_space_forward.1} parent=0 // pred_region
    _
  $region13: #{lstm_instance_space_forward.1} parent=0 // pred_fallthru
    _
  // Predicated region
  $region14: #{lstm_instance_space_forward.1} parent=0 // pred_check
    _
  $region15: #{lstm_instance_space_forward.1} parent=0 // pred_check_branch
    %1121 = sbr.rel (0) target = $region17
  $region16: #{lstm_instance_space_forward.1} parent=0 // pred_region
    _
  $region17: #{lstm_instance_space_forward.1} parent=0 // pred_fallthru
    _

</llo_original>
